<compile_context>
chip_gen: v7x
topology: tpu7x:2x2x1
jax: 0.10.0
libtpu: 0.0.40
codegen_flags: <defaults>
</compile_context>

<pallas_src>
import functools

import jax
import jax.numpy as jnp
from jax.experimental import pallas as pl
from jax.experimental.pallas import tpu as pltpu


# ---------------------------------------------------------------------------
# Helpers
# ---------------------------------------------------------------------------
def _round_up(x: int, m: int) -> int:
    return ((x + m - 1) // m) * m


def _prefer_vpu(c: int, f: int) -> bool:
    """Generation-aware MXU/VPU crossover for the 1x1-conv contraction."""
    try:
        kind = jax.devices()[0].device_kind.lower()
    except Exception:  # pragma: no cover - defensive, e.g. no devices yet
        kind = ""
    if "v5 lite" in kind or "v5e" in kind or "v5lite" in kind:
        # v5e: 128-wide MXU + no f32 VPU FMA -> switch to MXU earlier.
        return c <= 8 and f <= 16
    # v6e/v7x: 256-wide MXU would be >90% idle at tiny C/F.
    return c <= 8 and f <= 32


def _choose_tiles(b: int, hw: int, c: int, f: int, *,
                  ts_cap: int = 65536,
                  step_target_bytes: int = 2 * 1024 * 1024,
                  vmem_budget_bytes: int = 16 * 1024 * 1024):
    """Pick (batch_block, spatial_tile). Spatial tile is lane-dense (x128)."""
    hw128 = _round_up(hw, 128)
    lane_bytes = (c + f) * 4                       # f32 x-lane + out-lane
    # Largest lane-dense tile whose double-buffered x/out tiles fit the budget.
    ts_fit = max(128, (vmem_budget_bytes // (2 * lane_bytes)) // 128 * 128)
    ts = min(hw128, ts_cap, ts_fit)
    # Small feature maps: amortize the ~0.35us step overhead over Bblk batches.
    bblk = 1
    if ts >= hw128:
        per_batch = lane_bytes * ts
        bblk = max(1, min(b,
                          step_target_bytes // max(1, per_batch),
                          vmem_budget_bytes // max(1, 2 * per_batch)))
    return int(bblk), int(ts)


def _vmem_limit_bytes(bblk: int, ts: int, c: int, f: int) -> int:
    """Scoped-VMEM limit from the actual double-buffered footprint."""
    x_tile = bblk * c * ts * 4
    o_tile = bblk * f * ts * 4
    fixed = (f * c + f) * 4 * 2 + bblk * f * 128 * 4     # weights/bias + scratch
    limit = 2 * (x_tile + o_tile) + fixed + (4 << 20)    # headroom
    return int(min(max(limit, 16 << 20), 48 << 20))      # v7x physical = 64 MiB


def _conv1x1_compute(x_bcs, w_fc, b_f1, use_mxu: bool):
    """y[b, f, s] = sum_c w[f, c] * x[b, c, s] + bias[f].  x_bcs: (Bblk, C, TS) f32."""
    bblk, C, _ = x_bcs.shape
    if not use_mxu:
        # Tiny contraction: unrolled VPU multiply-accumulate; bias folded into
        # the first MAC (no separate broadcast init per step).
        acc = x_bcs[:, 0:1, :] * w_fc[None, :, 0:1] + b_f1[None]
        for c in range(1, C):
            acc = acc + x_bcs[:, c:c + 1, :] * w_fc[None, :, c:c + 1]
        return acc
    # Larger C/F: MXU matmul with f32 accumulation, one pass per batch element
    # (static unroll, keeps the lane axis last without in-kernel transposes).
    outs = [jnp.dot(w_fc, x_bcs[i], preferred_element_type=jnp.float32) + b_f1
            for i in range(bblk)]
    return jnp.stack(outs, axis=0)


# ---------------------------------------------------------------------------
# Kernel 1: 1x1 conv, lane-major spatial output (aggregate=False path).
# ---------------------------------------------------------------------------
def _conv1x1_flat_kernel(x_ref, w_ref, b_ref, o_ref, *, use_mxu):
    # x_ref: (Bblk, C, TS)  w_ref: (F, C)  b_ref: (F, 1)  o_ref: (Bblk, F, TS)
    y = _conv1x1_compute(x_ref[...], w_ref[...], b_ref[...], use_mxu)
    o_ref[...] = y.astype(o_ref.dtype)


def conv1x1_flat(x_bcs, w_fc, b_f1, *, ts, bblk, use_mxu):
    """x_bcs: (B, C, HW) -> (B, F, HW); conv1x1 along the lane (spatial) axis."""
    B, C, HW = x_bcs.shape
    F = w_fc.shape[0]
    kernel = functools.partial(_conv1x1_flat_kernel, use_mxu=use_mxu)
    return pl.pallas_call(
        kernel,
        out_shape=jax.ShapeDtypeStruct((B, F, HW), jnp.float32),
        grid_spec=pltpu.PrefetchScalarGridSpec(
            num_scalar_prefetch=0,
            grid=(pl.cdiv(B, bblk), pl.cdiv(HW, ts)),
            in_specs=[
                pl.BlockSpec((bblk, C, ts), lambda b, s: (b, 0, s)),
                # Weight / bias are tiny and grid-invariant (constant block
                # index -> fetched once, never re-DMA'd).
                pl.BlockSpec((F, C), lambda b, s: (0, 0)),
                pl.BlockSpec((F, 1), lambda b, s: (0, 0)),
            ],
            out_specs=pl.BlockSpec((bblk, F, ts), lambda b, s: (b, 0, s)),
        ),
        compiler_params=pltpu.CompilerParams(
            dimension_semantics=("parallel", "parallel"),
            vmem_limit_bytes=_vmem_limit_bytes(bblk, ts, C, F),
        ),
    )(x_bcs, w_fc, b_f1)


# ---------------------------------------------------------------------------
# Kernel 2: 1x1 conv + spatial max (aggregate=True path).
# Running max lives in a VMEM scratch; output written once at the last step.
# ---------------------------------------------------------------------------
def _conv1x1_max_kernel(x_ref, w_ref, b_ref, o_ref, acc_ref, *, hw, ts, use_mxu):
    # x_ref: (Bblk, C, TS)  w_ref: (F, C)  b_ref: (F, 1)
    # o_ref: (Bblk, F, 1)   acc_ref: (Bblk, F, 1) f32 scratch
    s = pl.program_id(1)
    n_s = pl.num_programs(1)
    y = _conv1x1_compute(x_ref[...], w_ref[...], b_ref[...], use_mxu)  # (Bblk,F,TS)

    @pl.when(s == 0)
    def _():
        acc_ref[...] = jnp.full_like(acc_ref, -jnp.inf)

    if hw % ts == 0:  # static: no ragged lanes anywhere
        acc_ref[...] = jnp.maximum(acc_ref[...],
                                   jnp.max(y, axis=-1, keepdims=True))
    else:
        # Only the final spatial block can contain out-of-bounds lanes; gate
        # the iota/compare/select mask to that step (cold path otherwise).
        @pl.when(s < n_s - 1)
        def _():
            acc_ref[...] = jnp.maximum(acc_ref[...],
                                       jnp.max(y, axis=-1, keepdims=True))

        @pl.when(s == n_s - 1)
        def _():
            pos = s * ts + jax.lax.broadcasted_iota(jnp.int32, y.shape, 2)
            ym = jnp.where(pos < hw, y, -jnp.inf)
            acc_ref[...] = jnp.maximum(acc_ref[...],
                                       jnp.max(ym, axis=-1, keepdims=True))

    @pl.when(s == n_s - 1)
    def _():
        o_ref[...] = acc_ref[...].astype(o_ref.dtype)


def conv1x1_spatial_max(x_bcs, w_fc, b_f1, *, hw, ts, bblk, use_mxu):
    """x_bcs: (B, C, HW) -> (B, F, 1) = max over the spatial axis."""
    B, C, HW = x_bcs.shape
    F = w_fc.shape[0]
    kernel = functools.partial(_conv1x1_max_kernel, hw=hw, ts=ts, use_mxu=use_mxu)
    return pl.pallas_call(
        kernel,
        out_shape=jax.ShapeDtypeStruct((B, F, 1), jnp.float32),
        grid_spec=pltpu.PrefetchScalarGridSpec(
            num_scalar_prefetch=0,
            grid=(pl.cdiv(B, bblk), pl.cdiv(HW, ts)),
            in_specs=[
                pl.BlockSpec((bblk, C, ts), lambda b, s: (b, 0, s)),
                pl.BlockSpec((F, C), lambda b, s: (0, 0)),
                pl.BlockSpec((F, 1), lambda b, s: (0, 0)),
            ],
            out_specs=pl.BlockSpec((bblk, F, 1), lambda b, s: (b, 0, 0)),
            scratch_shapes=[pltpu.VMEM((bblk, F, 1), jnp.float32)],
        ),
        compiler_params=pltpu.CompilerParams(
            # Batch axis parallel; spatial axis is the (innermost) reduction.
            dimension_semantics=("parallel", "arbitrary"),
            vmem_limit_bytes=_vmem_limit_bytes(bblk, ts, C, F),
        ),
    )(x_bcs, w_fc, b_f1)


# ---------------------------------------------------------------------------
# FeatureExtractor forward (wrapper / glue — reshapes only, no pad/slice/transpose).
# ---------------------------------------------------------------------------
def feature_extractor_forward(x_nchw, weight_fc, bias_f, *, aggregate=False,
                              ts=None, bblk=None):
    """x_nchw: (B, C, H, W) f32.
    weight_fc: (F, C) (PyTorch Conv2d weight (F, C, 1, 1) squeezed).
    bias_f: (F,)."""
    B, C, H, W = x_nchw.shape
    F = weight_fc.shape[0]
    HW = H * W

    # NCHW is already spatial-last: pure reshape, no pad, no HBM round-trip.
    x_bcs = x_nchw.reshape(B, C, HW)
    auto_bblk, auto_ts = _choose_tiles(B, HW, C, F)
    ts = auto_ts if ts is None else ts
    bblk = auto_bblk if bblk is None else bblk

    w_fc = weight_fc.astype(jnp.float32).reshape(F, C)
    b_f1 = bias_f.astype(jnp.float32).reshape(F, 1)
    use_mxu = not _prefer_vpu(C, F)

    if aggregate:
        y = conv1x1_spatial_max(x_bcs, w_fc, b_f1, hw=HW, ts=ts, bblk=bblk,
                                use_mxu=use_mxu)                   # (B, F, 1)
        return y.reshape(B, F)

    y = conv1x1_flat(x_bcs, w_fc, b_f1, ts=ts, bblk=bblk, use_mxu=use_mxu)  # (B,F,HW)
    # flatten(start_dim=1) of the NCHW conv output is a free reshape here.
    return y.reshape(B, F * HW)


# ---------------------------------------------------------------------------
# Demo / self-check
# ---------------------------------------------------------------------------
if __name__ == "__main__":
    key = jax.random.PRNGKey(0)
    k_x, k_w, k_b = jax.random.split(key, 3)

    B, C, F = 2, 4, 8
    bound = 1.0 / (C ** 0.5)
    weight = jax.random.uniform(k_w, (F, C), jnp.float32, -bound, bound)
    bias = jax.random.uniform(k_b, (F,), jnp.float32, -bound, bound)

    def reference(xx):
        y = (xx[:, None, :, :, :] * weight[None, :, :, None, None]).sum(axis=2)
        y = y + bias[None, :, None, None]
        b_, f_, h_, w_ = y.shape
        return y.reshape(b_, f_ * h_ * w_), jnp.max(y, axis=(2, 3))

    def check(h, w, key_x, **kw):
        x = jax.random.normal(key_x, (B, C, h, w), dtype=jnp.float32)
        out_flat = jax.block_until_ready(
            feature_extractor_forward(x, weight, bias, aggregate=False, **kw))
        out_agg = jax.block_until_ready(
            feature_extractor_forward(x, weight, bias, aggregate=True, **kw))
        ref_flat, ref_agg = reference(x)
        assert out_flat.shape == (B, F * h * w)
        assert out_agg.shape == (B, F)
        assert jnp.allclose(out_flat, ref_flat, atol=1e-5, rtol=1e-5)
        assert jnp.allclose(out_agg, ref_agg, atol=1e-5, rtol=1e-5)

    # 1) Lane-aligned spatial size (16x16 = 256): batch-blocked single-step path.
    check(16, 16, k_x)
    # 2) Ragged spatial size (10x10 = 100): in-kernel mask + clipped output block.
    check(10, 10, jax.random.fold_in(k_x, 1))
    # 3) Multi-block spatial reduction with a ragged final block (forced ts=128).
    check(9, 30, jax.random.fold_in(k_x, 2), ts=128)

    print("KERNEL_OK")
</pallas_src>

<mosaic_0001>
module attributes {stable_mosaic.version = 11 : i64} {
  func.func @_conv1x1_flat_kernel(%arg0: i32, %arg1: i32, %arg2: memref<2x4x256xf32, #tpu.memory_space<vmem>>, %arg3: memref<8x4xf32, #tpu.memory_space<vmem>>, %arg4: memref<8x1xf32, #tpu.memory_space<vmem>>, %arg5: memref<2x8x256xf32, #tpu.memory_space<vmem>>) attributes {dimension_semantics = [#tpu.dimension_semantics<parallel>, #tpu.dimension_semantics<parallel>], iteration_bounds = array<i64: 1, 1>, scalar_prefetch = 0 : i64, scratch_operands = 0 : i64, tpu.core_type = #tpu.core_type<tc>, window_params = [{transform_indices = @transform_0, window_bounds = array<i64: 2, 4, 256>}, {pipeline_mode = #tpu.pipeline_mode<synchronous>, transform_indices = @transform_1, window_bounds = array<i64: 8, 4>}, {pipeline_mode = #tpu.pipeline_mode<synchronous>, transform_indices = @transform_2, window_bounds = array<i64: 8, 1>}, {transform_indices = @transform_3, window_bounds = array<i64: 2, 8, 256>}]} {
    %c0 = arith.constant 0 : index
    %c0_0 = arith.constant 0 : index
    %c0_1 = arith.constant 0 : index
    %0 = vector.load %arg2[%c0, %c0_0, %c0_1] : memref<2x4x256xf32, #tpu.memory_space<vmem>>, vector<2x4x256xf32>
    %c0_2 = arith.constant 0 : index
    %c0_3 = arith.constant 0 : index
    %1 = vector.load %arg3[%c0_2, %c0_3] : memref<8x4xf32, #tpu.memory_space<vmem>>, vector<8x4xf32>
    %c0_4 = arith.constant 0 : index
    %c0_5 = arith.constant 0 : index
    %2 = vector.load %arg4[%c0_4, %c0_5] : memref<8x1xf32, #tpu.memory_space<vmem>>, vector<8x1xf32>
    %3 = vector.extract_strided_slice %0 {offsets = [0, 0, 0], sizes = [2, 1, 256], strides = [1, 1, 1]} : vector<2x4x256xf32> to vector<2x1x256xf32>
    %4 = vector.extract_strided_slice %1 {offsets = [0, 0], sizes = [8, 1], strides = [1, 1]} : vector<8x4xf32> to vector<8x1xf32>
    %5 = vector.shape_cast %4 : vector<8x1xf32> to vector<1x8x1xf32>
    %6 = vector.broadcast %3 : vector<2x1x256xf32> to vector<2x8x256xf32>
    %7 = vector.broadcast %5 : vector<1x8x1xf32> to vector<2x8x256xf32>
    %8 = arith.mulf %6, %7 : vector<2x8x256xf32>
    %9 = vector.shape_cast %2 : vector<8x1xf32> to vector<1x8x1xf32>
    %10 = vector.broadcast %9 : vector<1x8x1xf32> to vector<2x8x256xf32>
    %11 = arith.addf %8, %10 : vector<2x8x256xf32>
    %12 = vector.extract_strided_slice %0 {offsets = [0, 1, 0], sizes = [2, 1, 256], strides = [1, 1, 1]} : vector<2x4x256xf32> to vector<2x1x256xf32>
    %13 = vector.extract_strided_slice %1 {offsets = [0, 1], sizes = [8, 1], strides = [1, 1]} : vector<8x4xf32> to vector<8x1xf32>
    %14 = vector.shape_cast %13 : vector<8x1xf32> to vector<1x8x1xf32>
    %15 = vector.broadcast %12 : vector<2x1x256xf32> to vector<2x8x256xf32>
    %16 = vector.broadcast %14 : vector<1x8x1xf32> to vector<2x8x256xf32>
    %17 = arith.mulf %15, %16 : vector<2x8x256xf32>
    %18 = arith.addf %11, %17 : vector<2x8x256xf32>
    %19 = vector.extract_strided_slice %0 {offsets = [0, 2, 0], sizes = [2, 1, 256], strides = [1, 1, 1]} : vector<2x4x256xf32> to vector<2x1x256xf32>
    %20 = vector.extract_strided_slice %1 {offsets = [0, 2], sizes = [8, 1], strides = [1, 1]} : vector<8x4xf32> to vector<8x1xf32>
    %21 = vector.shape_cast %20 : vector<8x1xf32> to vector<1x8x1xf32>
    %22 = vector.broadcast %19 : vector<2x1x256xf32> to vector<2x8x256xf32>
    %23 = vector.broadcast %21 : vector<1x8x1xf32> to vector<2x8x256xf32>
    %24 = arith.mulf %22, %23 : vector<2x8x256xf32>
    %25 = arith.addf %18, %24 : vector<2x8x256xf32>
    %26 = vector.extract_strided_slice %0 {offsets = [0, 3, 0], sizes = [2, 1, 256], strides = [1, 1, 1]} : vector<2x4x256xf32> to vector<2x1x256xf32>
    %27 = vector.extract_strided_slice %1 {offsets = [0, 3], sizes = [8, 1], strides = [1, 1]} : vector<8x4xf32> to vector<8x1xf32>
    %28 = vector.shape_cast %27 : vector<8x1xf32> to vector<1x8x1xf32>
    %29 = vector.broadcast %26 : vector<2x1x256xf32> to vector<2x8x256xf32>
    %30 = vector.broadcast %28 : vector<1x8x1xf32> to vector<2x8x256xf32>
    %31 = arith.mulf %29, %30 : vector<2x8x256xf32>
    %32 = arith.addf %25, %31 : vector<2x8x256xf32>
    %c0_6 = arith.constant 0 : index
    %c0_7 = arith.constant 0 : index
    %c0_8 = arith.constant 0 : index
    %33 = vector.load %arg5[%c0_6, %c0_7, %c0_8] : memref<2x8x256xf32, #tpu.memory_space<vmem>>, vector<2x8x256xf32>
    tpu.vector_store %arg5[%c0_6, %c0_7, %c0_8], %32 {strides = array<i32>} : memref<2x8x256xf32, #tpu.memory_space<vmem>>, vector<2x8x256xf32>,
    return
  }
  func.func @transform_0(%arg0: i32, %arg1: i32) -> (i32, i32, i32) {
    %c0_i32 = arith.constant 0 : i32
    %c0_i32_0 = arith.constant 0 : i32
    return %arg0, %c0_i32, %arg1 : i32, i32, i32
  }
  func.func @transform_1(%arg0: i32, %arg1: i32) -> (i32, i32) {
    %c0_i32 = arith.constant 0 : i32
    %c0_i32_0 = arith.constant 0 : i32
    %c0_i32_1 = arith.constant 0 : i32
    return %c0_i32, %c0_i32_0 : i32, i32
  }
  func.func @transform_2(%arg0: i32, %arg1: i32) -> (i32, i32) {
    %c0_i32 = arith.constant 0 : i32
    %c0_i32_0 = arith.constant 0 : i32
    %c0_i32_1 = arith.constant 0 : i32
    return %c0_i32, %c0_i32_0 : i32, i32
  }
  func.func @transform_3(%arg0: i32, %arg1: i32) -> (i32, i32, i32) {
    %c0_i32 = arith.constant 0 : i32
    %c0_i32_0 = arith.constant 0 : i32
    return %arg0, %c0_i32, %arg1 : i32, i32, i32
  }
}

</mosaic_0001>

<llo_original>
// kernel: tpu_custom_call.1
$region0: #{tpu_custom_call.1}
  #allocation0 [shape = 'u32[]', space=smem, size = 0x4, offset = 0x4, fixed_abs, tag = 'smem constant byte address 0x4 - core index']
  #allocation1 [shape = 'u32[144,128]{1,0:T(1,128)}', space=vmem, size = 0x12000, scoped, tag = 'internal scratch']
  %s0 = inlined_call_operand.vmem [shape: f32[2,4,256], index: 0, kind: input, shape index: {}]
  %s1 = inlined_call_operand.vmem [shape: f32[8,4], index: 1, kind: input, shape index: {}]
  %s2 = inlined_call_operand.vmem [shape: f32[8,1], index: 2, kind: input, shape index: {}]
  %s3 = inlined_call_operand.hbm [shape: f32[2,8,256], index: 3, kind: output, shape index: {}]
  %s4 = sld [smem:[#allocation0]]
  $region22: #{tpu_custom_call.1} parent=0
    _
  %s6 = ssub.s32 1, %s4
  %s7 = scalar_select 0, %s6, %s4
  $region1: #{tpu_custom_call.1} parent=0
    #allocation2 [shape = 'u8[16384]{0}', space=vmem, size = 0x4000, scoped, tag = 'output window, operand 0, single buffered']
    #allocation3 [shape = 's32[1]{0}', space=sflag, size = 0x4, scoped, tag = 'scoped memory for tpu_custom_call.1']
    %8 = vsyncpa [#allocation3], 0
    // Predicated region
    $region2: #{tpu_custom_call.1} parent=1 // pred_check
      _
    $region3: #{tpu_custom_call.1} parent=1 // pred_check_branch
      %10 = sbr.rel (0) target = $region5
    $region4: #{tpu_custom_call.1} parent=1 // pred_region
      _
    $region5: #{tpu_custom_call.1} parent=1 // pred_fallthru
      _
    // Predicated region
    $region6: #{tpu_custom_call.1} parent=1 // pred_check
      _
    $region7: #{tpu_custom_call.1} parent=1 // pred_check_branch
      %12 = sbr.rel (0) target = $region9
    $region8: #{tpu_custom_call.1} parent=1 // pred_region
      _
    $region9: #{tpu_custom_call.1} parent=1 // pred_fallthru
      _
    // Predicated region
    $region10: #{tpu_custom_call.1} parent=1 // pred_check
      _
    $region11: #{tpu_custom_call.1} parent=1 // pred_check_branch
      %14 = sbr.rel (0) target = $region13
    $region12: #{tpu_custom_call.1} parent=1 // pred_region
      _
    $region13: #{tpu_custom_call.1} parent=1 // pred_fallthru
      _
    %v15 = vld [vmem:[%s0] sm:$0xff]
    %v16 = vld [vmem:[%s0 + $0x8] sm:$0xff]
    %v17 = vld [vmem:[%s1] sm:$0xff]
    %v18 = vld [vmem:[%s2] sm:$0xff]
    %v21 = vlaneseq
    %v22 = vshrl.u32 %v21, 7
    %v23 = vsub.s32 0, %v22
    %v24 = vrot.slane %v15, %v23
    %v25 = vlaneseq
    %v26 = vshrl.u32 %v25, 7
    %v27 = vsub.s32 4, %v26
    %v28 = vrot.slane %v15, %v27
    %v29 = vlaneseq
    %v30 = vshrl.u32 %v29, 7
    %v31 = vsub.s32 0, %v30
    %v32 = vrot.slane %v16, %v31
    %v33 = vlaneseq
    %v34 = vshrl.u32 %v33, 7
    %v35 = vsub.s32 4, %v34
    %v36 = vrot.slane %v16, %v35
    %v41 = vlaneseq
    %v42 = vshrl.u32 %v41, 7
    %v43 = vsub.s32 0, %v42
    %v44 = vrot.slane %v24, %v43
    %v45 = vlaneseq
    %v46 = vshrl.u32 %v45, 7
    %v47 = vsub.s32 0, %v46
    %v48 = vrot.slane %v28, %v47
    %v49 = vlaneseq
    %v50 = vshrl.u32 %v49, 7
    %v51 = vsub.s32 0, %v50
    %v52 = vrot.slane %v32, %v51
    %v53 = vlaneseq
    %v54 = vshrl.u32 %v53, 7
    %v55 = vsub.s32 0, %v54
    %v56 = vrot.slane %v36, %v55
    %58 = vset.pattern.permute.xlu0 0
    %59 = vperm.xlu0 %58, %v17
    %v60 = vpop.permute.xlu0 %59
    %v62 = vmul.f32 %v44, %v60
    %v63 = vmul.f32 %v48, %v60
    %v64 = vmul.f32 %v52, %v60
    %v65 = vmul.f32 %v56, %v60
    %67 = vset.pattern.permute.xlu0 0
    %68 = vperm.xlu0 %67, %v18
    %v69 = vpop.permute.xlu0 %68
    %v71 = vadd.f32 %v62, %v69
    %v72 = vadd.f32 %v63, %v69
    %v73 = vadd.f32 %v64, %v69
    %v74 = vadd.f32 %v65, %v69
    %v75 = vlaneseq
    %v76 = vshrl.u32 %v75, 7
    %v77 = vsub.s32 1, %v76
    %v78 = vrot.slane %v15, %v77
    %v79 = vlaneseq
    %v80 = vshrl.u32 %v79, 7
    %v81 = vsub.s32 5, %v80
    %v82 = vrot.slane %v15, %v81
    %v83 = vlaneseq
    %v84 = vshrl.u32 %v83, 7
    %v85 = vsub.s32 1, %v84
    %v86 = vrot.slane %v16, %v85
    %v87 = vlaneseq
    %v88 = vshrl.u32 %v87, 7
    %v89 = vsub.s32 5, %v88
    %v90 = vrot.slane %v16, %v89
    %v95 = vlaneseq
    %v96 = vshrl.u32 %v95, 7
    %v97 = vsub.s32 1, %v96
    %v98 = vrot.slane %v78, %v97
    %v99 = vlaneseq
    %v100 = vshrl.u32 %v99, 7
    %v101 = vsub.s32 1, %v100
    %v102 = vrot.slane %v82, %v101
    %v103 = vlaneseq
    %v104 = vshrl.u32 %v103, 7
    %v105 = vsub.s32 1, %v104
    %v106 = vrot.slane %v86, %v105
    %v107 = vlaneseq
    %v108 = vshrl.u32 %v107, 7
    %v109 = vsub.s32 1, %v108
    %v110 = vrot.slane %v90, %v109
    %111 = vset.pattern.permute.xlu0 1
    %112 = vperm.xlu0 %111, %v17
    %v113 = vpop.permute.xlu0 %112
    %v115 = vmul.f32 %v98, %v113
    %v116 = vmul.f32 %v102, %v113
    %v117 = vmul.f32 %v106, %v113
    %v118 = vmul.f32 %v110, %v113
    %v119 = vadd.f32 %v71, %v115
    %v120 = vadd.f32 %v72, %v116
    %v121 = vadd.f32 %v73, %v117
    %v122 = vadd.f32 %v74, %v118
    %v123 = vlaneseq
    %v124 = vshrl.u32 %v123, 7
    %v125 = vsub.s32 2, %v124
    %v126 = vrot.slane %v15, %v125
    %v127 = vlaneseq
    %v128 = vshrl.u32 %v127, 7
    %v129 = vsub.s32 6, %v128
    %v130 = vrot.slane %v15, %v129
    %v131 = vlaneseq
    %v132 = vshrl.u32 %v131, 7
    %v133 = vsub.s32 2, %v132
    %v134 = vrot.slane %v16, %v133
    %v135 = vlaneseq
    %v136 = vshrl.u32 %v135, 7
    %v137 = vsub.s32 6, %v136
    %v138 = vrot.slane %v16, %v137
    %v143 = vlaneseq
    %v144 = vshrl.u32 %v143, 7
    %v145 = vsub.s32 2, %v144
    %v146 = vrot.slane %v126, %v145
    %v147 = vlaneseq
    %v148 = vshrl.u32 %v147, 7
    %v149 = vsub.s32 2, %v148
    %v150 = vrot.slane %v130, %v149
    %v151 = vlaneseq
    %v152 = vshrl.u32 %v151, 7
    %v153 = vsub.s32 2, %v152
    %v154 = vrot.slane %v134, %v153
    %v155 = vlaneseq
    %v156 = vshrl.u32 %v155, 7
    %v157 = vsub.s32 2, %v156
    %v158 = vrot.slane %v138, %v157
    %159 = vset.pattern.permute.xlu0 2
    %160 = vperm.xlu0 %159, %v17
    %v161 = vpop.permute.xlu0 %160
    %v163 = vmul.f32 %v146, %v161
    %v164 = vmul.f32 %v150, %v161
    %v165 = vmul.f32 %v154, %v161
    %v166 = vmul.f32 %v158, %v161
    %v167 = vadd.f32 %v119, %v163
    %v168 = vadd.f32 %v120, %v164
    %v169 = vadd.f32 %v121, %v165
    %v170 = vadd.f32 %v122, %v166
    %v171 = vlaneseq
    %v172 = vshrl.u32 %v171, 7
    %v173 = vsub.s32 3, %v172
    %v174 = vrot.slane %v15, %v173
    %v175 = vlaneseq
    %v176 = vshrl.u32 %v175, 7
    %v177 = vsub.s32 7, %v176
    %v178 = vrot.slane %v15, %v177
    %v179 = vlaneseq
    %v180 = vshrl.u32 %v179, 7
    %v181 = vsub.s32 3, %v180
    %v182 = vrot.slane %v16, %v181
    %v183 = vlaneseq
    %v184 = vshrl.u32 %v183, 7
    %v185 = vsub.s32 7, %v184
    %v186 = vrot.slane %v16, %v185
    %v191 = vlaneseq
    %v192 = vshrl.u32 %v191, 7
    %v193 = vsub.s32 3, %v192
    %v194 = vrot.slane %v174, %v193
    %v195 = vlaneseq
    %v196 = vshrl.u32 %v195, 7
    %v197 = vsub.s32 3, %v196
    %v198 = vrot.slane %v178, %v197
    %v199 = vlaneseq
    %v200 = vshrl.u32 %v199, 7
    %v201 = vsub.s32 3, %v200
    %v202 = vrot.slane %v182, %v201
    %v203 = vlaneseq
    %v204 = vshrl.u32 %v203, 7
    %v205 = vsub.s32 3, %v204
    %v206 = vrot.slane %v186, %v205
    %207 = vset.pattern.permute.xlu0 3
    %208 = vperm.xlu0 %207, %v17
    %v209 = vpop.permute.xlu0 %208
    %v211 = vmul.f32 %v194, %v209
    %v212 = vmul.f32 %v198, %v209
    %v213 = vmul.f32 %v202, %v209
    %v214 = vmul.f32 %v206, %v209
    %v215 = vadd.f32 %v167, %v211
    %v216 = vadd.f32 %v168, %v212
    %v217 = vadd.f32 %v169, %v213
    %v218 = vadd.f32 %v170, %v214
    %219 = vst [vmem:[#allocation2] sm:$0xff] %v215
    %220 = vst [vmem:[#allocation2 + $0x8] sm:$0xff] %v216
    %221 = vst [vmem:[#allocation2 + $0x10] sm:$0xff] %v217
    %222 = vst [vmem:[#allocation2 + $0x18] sm:$0xff] %v218
    // Predicated region
    $region14: #{tpu_custom_call.1} parent=1 // pred_check
      _
    $region15: #{tpu_custom_call.1} parent=1 // pred_check_branch
      %224 = sbr.rel (0) target = $region17
    $region16: #{tpu_custom_call.1} parent=1 // pred_region
      %s226 = ssub.s32 512, 512
      %227 = vsyncadd [#allocation3], %s226
      %s228 = sshll.u32 [#allocation2], 4
      %s229 = int_to_ptr.vmem [resolvable:$true] %s228
      %234 = dma.vmem_to_hbm [thread:$0]  %s229, 512, %s3, [#allocation3], 256, 256, 16
    $region17: #{tpu_custom_call.1} parent=1 // pred_fallthru
      _
    // Predicated region
    $region18: #{tpu_custom_call.1} parent=1 // pred_check
      _
    $region19: #{tpu_custom_call.1} parent=1 // pred_check_branch
      %236 = sbr.rel (0) target = $region21
    $region20: #{tpu_custom_call.1} parent=1 // pred_region
      %237 = dma.done [#allocation3], 512
    $region21: #{tpu_custom_call.1} parent=1 // pred_fallthru
      _
    %238 = vsyncpa [#allocation3], 1

</llo_original>
